<compile_context>
chip_gen: v5e
topology: v5e:2x2
jax: 0.10.0
libtpu: 0.0.40
codegen_flags: <defaults>
</compile_context>

<pallas_src>
import functools

import jax
import jax.numpy as jnp
from jax.experimental import pallas as pl
from jax.experimental.pallas import tpu as pltpu


LANE = 128           # Cout padded to a multiple of this -> unmasked lane-dense stores
MAX_BLOCK_M = 512    # row-tile cap (VMEM-safe on v5e/v6e/v7x)
MAX_BLOCK_K = 512    # contraction-tile cap (multiple of 256 -> MXU-aligned on v6e/v7x)


def _round_up(x, m):
    return ((x + m - 1) // m) * m


def _conv_bn_relu_kernel(p_ref, w_ref, bias_ref, o_ref, acc_ref):
    """acc += patches @ W_fused; at the last K step: o = relu(acc + bias)."""
    kt = pl.program_id(1)

    @pl.when(kt == 0)
    def _():
        acc_ref[...] = jnp.zeros_like(acc_ref)

    acc_ref[...] += jnp.dot(p_ref[...], w_ref[...],
                            preferred_element_type=jnp.float32)

    @pl.when(kt == pl.num_programs(1) - 1)
    def _():
        o_ref[...] = jnp.maximum(acc_ref[...] + bias_ref[...], 0.0).astype(o_ref.dtype)


def _im2col_nhwc(x_nhwc, k, stride):
    """(N, H, W, C) -> (N*Ho*Wo, k*k*C); K ordered (kh, kw, ci)."""
    n, h, w, c = x_nhwc.shape
    ho = (h - k) // stride + 1
    wo = (w - k) // stride + 1
    cols = [
        x_nhwc[:, kh:kh + stride * ho:stride, kw:kw + stride * wo:stride, :]
        for kh in range(k) for kw in range(k)
    ]                                                   # k*k x (N, Ho, Wo, C)
    patches = jnp.concatenate(cols, axis=-1)            # (N, Ho, Wo, k*k*C)
    return patches.reshape(n * ho * wo, k * k * c), ho, wo


@functools.partial(jax.jit,
                   static_argnames=("kernel_size", "downsample", "padding", "eps"))
def basic_conv2d_block(x, conv_w, conv_b, bn_gamma, bn_beta, bn_mean, bn_var,
                       *, kernel_size, downsample=True, padding=0, eps=1e-5):
    """Forward pass of BasicConv2dBlock.  x: (N, Cin, H, W) float32 (NCHW)."""
    stride = 2 if downsample else 1
    n, cin, _, _ = x.shape
    cout = conv_w.shape[0]
    k = kernel_size

    # ---- host-side folding & layout glue (all fused under jit) --------------
    # bf16 BEFORE transpose/im2col: halves the pre-pass HBM traffic.
    x_nhwc = jnp.transpose(x.astype(jnp.bfloat16), (0, 2, 3, 1))   # NCHW -> NHWC
    if padding:
        x_nhwc = jnp.pad(
            x_nhwc, ((0, 0), (padding, padding), (padding, padding), (0, 0)))
    patches, ho, wo = _im2col_nhwc(x_nhwc, k, stride)   # (M, K) bf16
    m, kk = patches.shape

    # Fold BatchNorm (running stats) into the conv weights / bias (f32 math).
    bn_scale = bn_gamma / jnp.sqrt(bn_var + eps)        # (Cout,)
    # weight (Cout, Cin, kh, kw) -> (kh, kw, Cin, Cout) -> (K, Cout)
    w2d = jnp.transpose(conv_w, (2, 3, 1, 0)).reshape(kk, cout) * bn_scale[None, :]
    fused_bias = (conv_b - bn_mean) * bn_scale + bn_beta            # (Cout,)

    # lane-dense output: pad Cout up to a multiple of 128
    cout_pad = _round_up(cout, LANE)
    w2d = jnp.pad(w2d, ((0, 0), (0, cout_pad - cout))).astype(jnp.bfloat16)
    fused_bias = jnp.pad(fused_bias, (0, cout_pad - cout))
    fused_bias = fused_bias.reshape(1, cout_pad).astype(jnp.float32)

    # K (contraction) tiling: single step for small kk, 512-deep chunks otherwise.
    if kk <= MAX_BLOCK_K:
        tk, kk_pad = kk, kk
    else:
        tk = MAX_BLOCK_K
        kk_pad = _round_up(kk, tk)
    if kk_pad != kk:
        patches = jnp.pad(patches, ((0, 0), (0, kk_pad - kk)))
        w2d = jnp.pad(w2d, ((0, kk_pad - kk), (0, 0)))
    num_k = kk_pad // tk

    # M tiling: guarantee >= 2 "parallel" steps when possible (v7x has 2 TCs).
    m_pad_lane = _round_up(m, LANE)
    if m_pad_lane >= 2 * LANE:
        half = (m_pad_lane // 2) // LANE * LANE
        block_m = max(LANE, min(MAX_BLOCK_M, half))
    else:
        block_m = m_pad_lane
    num_m = -(-m_pad_lane // block_m)
    m_pad = num_m * block_m
    if m_pad != m:
        patches = jnp.pad(patches, ((0, m_pad - m), (0, 0)))

    # Explicit VMEM budget: double-buffered inputs/outputs + f32 accumulator.
    vmem_need = (2 * block_m * tk * 2            # patch tiles (bf16, 2 bufs)
                 + 2 * tk * cout_pad * 2         # weight tiles (bf16, 2 bufs)
                 + 2 * cout_pad * 4              # bias (f32, 2 bufs)
                 + 2 * block_m * cout_pad * 4    # output tiles (f32, 2 bufs)
                 + block_m * cout_pad * 4)       # accumulator scratch
    vmem_limit = int(min(max(2 * vmem_need, 16 * 2**20), 48 * 2**20))

    cost = pl.CostEstimate(
        flops=2 * m_pad * kk_pad * cout_pad,
        transcendentals=0,
        bytes_accessed=(m_pad * kk_pad * 2 + kk_pad * cout_pad * 2
                        + cout_pad * 4 + m_pad * cout_pad * 4),
    )

    # ---- Pallas hot path -----------------------------------------------------
    out2d = pl.pallas_call(
        _conv_bn_relu_kernel,
        out_shape=jax.ShapeDtypeStruct((m_pad, cout_pad), jnp.float32),
        grid_spec=pltpu.PrefetchScalarGridSpec(
            num_scalar_prefetch=0,
            grid=(num_m, num_k),
            in_specs=[
                pl.BlockSpec((block_m, tk), lambda i, kt: (i, kt)),     # patches
                pl.BlockSpec((tk, cout_pad), lambda i, kt: (kt, 0)),    # fused W
                pl.BlockSpec((1, cout_pad), lambda i, kt: (0, 0)),      # fused bias
            ],
            out_specs=pl.BlockSpec((block_m, cout_pad), lambda i, kt: (i, 0)),
            scratch_shapes=[pltpu.VMEM((block_m, cout_pad), jnp.float32)],
        ),
        compiler_params=pltpu.CompilerParams(
            dimension_semantics=("parallel", "arbitrary"),
            vmem_limit_bytes=vmem_limit),
        cost_estimate=cost,
    )(patches, w2d, fused_bias)

    # Epilogue (fused under jit).  NCHW kept for PyTorch interface parity;
    # emit NHWC directly if the consumer accepts it.
    out2d = out2d[:m, :cout]
    out = out2d.reshape(n, ho, wo, cout)                # NHWC
    return jnp.transpose(out, (0, 3, 1, 2))             # back to NCHW


def _reference(x, conv_w, conv_b, bn_gamma, bn_beta, bn_mean, bn_var,
               *, kernel_size, downsample=True, eps=1e-5):
    stride = 2 if downsample else 1
    y = jax.lax.conv_general_dilated(
        x, conv_w, window_strides=(stride, stride), padding="VALID",
        dimension_numbers=("NCHW", "OIHW", "NCHW"))
    y = y + conv_b[None, :, None, None]
    scale = bn_gamma / jnp.sqrt(bn_var + eps)
    y = (y - bn_mean[None, :, None, None]) * scale[None, :, None, None] \
        + bn_beta[None, :, None, None]
    return jnp.maximum(y, 0.0)


if __name__ == "__main__":
    # BasicConv2dBlock(input_channels=4, output_channels=8, kernel_size=3,
    #                  downsample=True)  -> Conv2d stride=2, no padding.
    N, CIN, H, W = 2, 4, 16, 16
    COUT, K = 8, 3

    key = jax.random.PRNGKey(0)
    kx, kw, kb, kg, kbe, km, kv = jax.random.split(key, 7)

    x = jax.random.normal(kx, (N, CIN, H, W), dtype=jnp.float32)
    conv_w = jax.random.normal(kw, (COUT, CIN, K, K), dtype=jnp.float32) * 0.1
    conv_b = jax.random.normal(kb, (COUT,), dtype=jnp.float32) * 0.1
    bn_gamma = 1.0 + 0.1 * jax.random.normal(kg, (COUT,), dtype=jnp.float32)
    bn_beta = 0.1 * jax.random.normal(kbe, (COUT,), dtype=jnp.float32)
    bn_mean = 0.1 * jax.random.normal(km, (COUT,), dtype=jnp.float32)
    bn_var = jnp.abs(jax.random.normal(kv, (COUT,), dtype=jnp.float32)) + 0.5

    fwd = functools.partial(basic_conv2d_block, kernel_size=K, downsample=True)
    out = jax.block_until_ready(
        fwd(x, conv_w, conv_b, bn_gamma, bn_beta, bn_mean, bn_var))

    ref = _reference(x, conv_w, conv_b, bn_gamma, bn_beta, bn_mean, bn_var,
                     kernel_size=K, downsample=True)
    assert out.shape == (N, COUT, 7, 7), out.shape
    # bf16 operands (f32 accumulation) -> loosened tolerance vs. f32 reference.
    assert jnp.allclose(out, ref, atol=5e-2, rtol=5e-2), \
        float(jnp.max(jnp.abs(out - ref)))

    print("KERNEL_OK")
</pallas_src>

<mosaic_0001>
module attributes {stable_mosaic.version = 11 : i64} {
  func.func @_conv_bn_relu_kernel(%arg0: i32, %arg1: i32, %arg2: memref<128x36xbf16, #tpu.memory_space<vmem>>, %arg3: memref<36x128xbf16, #tpu.memory_space<vmem>>, %arg4: memref<1x128xf32, #tpu.memory_space<vmem>>, %arg5: memref<128x128xf32, #tpu.memory_space<vmem>>, %arg6: memref<128x128xf32, #tpu.memory_space<vmem>>) attributes {dimension_semantics = [#tpu.dimension_semantics<parallel>, #tpu.dimension_semantics<arbitrary>], iteration_bounds = array<i64: 1, 1>, scalar_prefetch = 0 : i64, scratch_operands = 1 : i64, tpu.core_type = #tpu.core_type<tc>, window_params = [{transform_indices = @transform_0, window_bounds = array<i64: 128, 36>}, {transform_indices = @transform_1, window_bounds = array<i64: 36, 128>}, {pipeline_mode = #tpu.pipeline_mode<synchronous>, transform_indices = @transform_2, window_bounds = array<i64: 1, 128>}, {transform_indices = @transform_3, window_bounds = array<i64: 128, 128>}]} {
    %c0_i32 = arith.constant 0 : i32
    %0 = arith.cmpi eq, %arg1, %c0_i32 : i32
    %1 = arith.extui %0 : i1 to i32
    %c0_i32_0 = arith.constant 0 : i32
    %2 = arith.cmpi ne, %1, %c0_i32_0 : i32
    scf.if %2 {
      %cst_10 = arith.constant 0.000000e+00 : f32
      %12 = vector.broadcast %cst_10 : f32 to vector<128x128xf32>
      %c0_11 = arith.constant 0 : index
      %c0_12 = arith.constant 0 : index
      %13 = vector.load %arg6[%c0_11, %c0_12] : memref<128x128xf32, #tpu.memory_space<vmem>>, vector<128x128xf32>
      tpu.vector_store %arg6[%c0_11, %c0_12], %12 {strides = array<i32>} : memref<128x128xf32, #tpu.memory_space<vmem>>, vector<128x128xf32>,
    } else {
    }
    %c0 = arith.constant 0 : index
    %c0_1 = arith.constant 0 : index
    %3 = vector.load %arg6[%c0, %c0_1] : memref<128x128xf32, #tpu.memory_space<vmem>>, vector<128x128xf32>
    %c0_2 = arith.constant 0 : index
    %c0_3 = arith.constant 0 : index
    %4 = vector.load %arg2[%c0_2, %c0_3] : memref<128x36xbf16, #tpu.memory_space<vmem>>, vector<128x36xbf16>
    %c0_4 = arith.constant 0 : index
    %c0_5 = arith.constant 0 : index
    %5 = vector.load %arg3[%c0_4, %c0_5] : memref<36x128xbf16, #tpu.memory_space<vmem>>, vector<36x128xbf16>
    %cst = arith.constant dense<0.000000e+00> : vector<128x128xf32>
    %6 = tpu.matmul %4, %5, %cst {dimension_numbers = #tpu.dot_dimension_numbers<[1], [0], [0], [1], [0, 0, 1, 1], [], []>} : vector<128x36xbf16>, vector<36x128xbf16>, vector<128x128xf32> -> vector<128x128xf32>
    %7 = arith.addf %3, %6 : vector<128x128xf32>
    %c0_6 = arith.constant 0 : index
    %c0_7 = arith.constant 0 : index
    %8 = vector.load %arg6[%c0_6, %c0_7] : memref<128x128xf32, #tpu.memory_space<vmem>>, vector<128x128xf32>
    tpu.vector_store %arg6[%c0_6, %c0_7], %7 {strides = array<i32>} : memref<128x128xf32, #tpu.memory_space<vmem>>, vector<128x128xf32>,
    %c0_i32_8 = arith.constant 0 : i32
    %9 = arith.cmpi eq, %arg1, %c0_i32_8 : i32
    %10 = arith.extui %9 : i1 to i32
    %c0_i32_9 = arith.constant 0 : i32
    %11 = arith.cmpi ne, %10, %c0_i32_9 : i32
    scf.if %11 {
      %c0_10 = arith.constant 0 : index
      %c0_11 = arith.constant 0 : index
      %12 = vector.load %arg6[%c0_10, %c0_11] : memref<128x128xf32, #tpu.memory_space<vmem>>, vector<128x128xf32>
      %c0_12 = arith.constant 0 : index
      %c0_13 = arith.constant 0 : index
      %13 = vector.load %arg4[%c0_12, %c0_13] : memref<1x128xf32, #tpu.memory_space<vmem>>, vector<1x128xf32>
      %14 = vector.broadcast %13 : vector<1x128xf32> to vector<128x128xf32>
      %15 = arith.addf %12, %14 : vector<128x128xf32>
      %cst_14 = arith.constant 0.000000e+00 : f32
      %16 = vector.broadcast %cst_14 : f32 to vector<128x128xf32>
      %17 = arith.maximumf %15, %16 : vector<128x128xf32>
      %c0_15 = arith.constant 0 : index
      %c0_16 = arith.constant 0 : index
      %18 = vector.load %arg5[%c0_15, %c0_16] : memref<128x128xf32, #tpu.memory_space<vmem>>, vector<128x128xf32>
      tpu.vector_store %arg5[%c0_15, %c0_16], %17 {strides = array<i32>} : memref<128x128xf32, #tpu.memory_space<vmem>>, vector<128x128xf32>,
    } else {
    }
    return
  }
  func.func @transform_0(%arg0: i32, %arg1: i32) -> (i32, i32) {
    %c0_i32 = arith.constant 0 : i32
    return %arg0, %arg1 : i32, i32
  }
  func.func @transform_1(%arg0: i32, %arg1: i32) -> (i32, i32) {
    %c0_i32 = arith.constant 0 : i32
    %c0_i32_0 = arith.constant 0 : i32
    return %arg1, %c0_i32 : i32, i32
  }
  func.func @transform_2(%arg0: i32, %arg1: i32) -> (i32, i32) {
    %c0_i32 = arith.constant 0 : i32
    %c0_i32_0 = arith.constant 0 : i32
    %c0_i32_1 = arith.constant 0 : i32
    return %c0_i32, %c0_i32_0 : i32, i32
  }
  func.func @transform_3(%arg0: i32, %arg1: i32) -> (i32, i32) {
    %c0_i32 = arith.constant 0 : i32
    %c0_i32_0 = arith.constant 0 : i32
    return %arg0, %c0_i32 : i32, i32
  }
}

</mosaic_0001>

<llo_original>
// kernel: basic_conv2d_block.1
$region0: #{basic_conv2d_block.1}
  #allocation0 [shape = 'u32[]', space=smem, size = 0x4, offset = 0x4, fixed_abs, tag = 'smem constant byte address 0x4 - core index']
  #allocation1 [shape = 'u32[72,128]{1,0:T(1,128)}', space=vmem, size = 0x9000, scoped, tag = 'internal scratch']
  #allocation2 [shape = 'f32[128,128]{1,0:T(8,128)}', space=vmem, size = 0x10000, scoped, tag = 'scratch operand']
  %s0 = inlined_call_operand.vmem [shape: bf16[128,36], index: 0, kind: input, shape index: {}]
  %s1 = inlined_call_operand.vmem [shape: bf16[36,128], index: 1, kind: input, shape index: {}]
  %s2 = inlined_call_operand.vmem [shape: f32[1,128], index: 2, kind: input, shape index: {}]
  %s3 = inlined_call_operand.vmem [shape: f32[128,128], index: 3, kind: output, shape index: {}]
  %s4 = sld [smem:[#allocation0]]
  $region30: #{basic_conv2d_block.1} parent=0
    _
  %s6 = ssub.s32 1, %s4
  %s7 = scalar_select 0, %s6, %s4
  // Predicated region
  $region2: #{basic_conv2d_block.1} parent=0 // pred_check
    _
  $region3: #{basic_conv2d_block.1} parent=0 // pred_check_branch
    %9 = sbr.rel (0) target = $region5
  $region4: #{basic_conv2d_block.1} parent=0 // pred_region
    _
  $region5: #{basic_conv2d_block.1} parent=0 // pred_fallthru
    _
  // Predicated region
  $region6: #{basic_conv2d_block.1} parent=0 // pred_check
    _
  $region7: #{basic_conv2d_block.1} parent=0 // pred_check_branch
    %11 = sbr.rel (0) target = $region9
  $region8: #{basic_conv2d_block.1} parent=0 // pred_region
    _
  $region9: #{basic_conv2d_block.1} parent=0 // pred_fallthru
    _
  // Predicated region
  $region10: #{basic_conv2d_block.1} parent=0 // pred_check
    _
  $region11: #{basic_conv2d_block.1} parent=0 // pred_check_branch
    %13 = sbr.rel (0) target = $region13
  $region12: #{basic_conv2d_block.1} parent=0 // pred_region
    _
  $region13: #{basic_conv2d_block.1} parent=0 // pred_fallthru
    _
  %p15 = scmp.eq.s32.totalorder 0, 0
  // Predicated region
  $region14: #{basic_conv2d_block.1} parent=0 // pred_check
    %p16 = pneg %p15
  $region15: #{basic_conv2d_block.1} parent=0 // pred_check_branch
    %18 = sbr.rel (%p16) target = $region17
  $region16: #{basic_conv2d_block.1} parent=0 // pred_region
    %19 = vst [vmem:[#allocation2] sm:$0xff] 0.0
    %20 = vst [vmem:[#allocation2 + $0x8] sm:$0xff] 0.0
    %21 = vst [vmem:[#allocation2 + $0x10] sm:$0xff] 0.0
    %22 = vst [vmem:[#allocation2 + $0x18] sm:$0xff] 0.0
    %23 = vst [vmem:[#allocation2 + $0x20] sm:$0xff] 0.0
    %24 = vst [vmem:[#allocation2 + $0x28] sm:$0xff] 0.0
    %25 = vst [vmem:[#allocation2 + $0x30] sm:$0xff] 0.0
    %26 = vst [vmem:[#allocation2 + $0x38] sm:$0xff] 0.0
    %27 = vst [vmem:[#allocation2 + $0x40] sm:$0xff] 0.0
    %28 = vst [vmem:[#allocation2 + $0x48] sm:$0xff] 0.0
    %29 = vst [vmem:[#allocation2 + $0x50] sm:$0xff] 0.0
    %30 = vst [vmem:[#allocation2 + $0x58] sm:$0xff] 0.0
    %31 = vst [vmem:[#allocation2 + $0x60] sm:$0xff] 0.0
    %32 = vst [vmem:[#allocation2 + $0x68] sm:$0xff] 0.0
    %33 = vst [vmem:[#allocation2 + $0x70] sm:$0xff] 0.0
    %34 = vst [vmem:[#allocation2 + $0x78] sm:$0xff] 0.0
  $region17: #{basic_conv2d_block.1} parent=0 // pred_fallthru
    _
  %v35 = vld [vmem:[#allocation2] sm:$0xff]
  %v36 = vld [vmem:[#allocation2 + $0x8] sm:$0xff]
  %v37 = vld [vmem:[#allocation2 + $0x10] sm:$0xff]
  %v38 = vld [vmem:[#allocation2 + $0x18] sm:$0xff]
  %v39 = vld [vmem:[#allocation2 + $0x20] sm:$0xff]
  %v40 = vld [vmem:[#allocation2 + $0x28] sm:$0xff]
  %v41 = vld [vmem:[#allocation2 + $0x30] sm:$0xff]
  %v42 = vld [vmem:[#allocation2 + $0x38] sm:$0xff]
  %v43 = vld [vmem:[#allocation2 + $0x40] sm:$0xff]
  %v44 = vld [vmem:[#allocation2 + $0x48] sm:$0xff]
  %v45 = vld [vmem:[#allocation2 + $0x50] sm:$0xff]
  %v46 = vld [vmem:[#allocation2 + $0x58] sm:$0xff]
  %v47 = vld [vmem:[#allocation2 + $0x60] sm:$0xff]
  %v48 = vld [vmem:[#allocation2 + $0x68] sm:$0xff]
  %v49 = vld [vmem:[#allocation2 + $0x70] sm:$0xff]
  %v50 = vld [vmem:[#allocation2 + $0x78] sm:$0xff]
  %v51 = vld [vmem:[%s0] sm:$0xf]
  %v52 = vld [vmem:[%s0 + $0x4] sm:$0xf]
  %v53 = vld [vmem:[%s0 + $0x8] sm:$0xf]
  %v54 = vld [vmem:[%s0 + $0xc] sm:$0xf]
  %v55 = vld [vmem:[%s0 + $0x10] sm:$0xf]
  %v56 = vld [vmem:[%s0 + $0x14] sm:$0xf]
  %v57 = vld [vmem:[%s0 + $0x18] sm:$0xf]
  %v58 = vld [vmem:[%s0 + $0x1c] sm:$0xf]
  %v59 = vld [vmem:[%s0 + $0x20] sm:$0xf]
  %v60 = vld [vmem:[%s0 + $0x24] sm:$0xf]
  %v61 = vld [vmem:[%s0 + $0x28] sm:$0xf]
  %v62 = vld [vmem:[%s0 + $0x2c] sm:$0xf]
  %v63 = vld [vmem:[%s0 + $0x30] sm:$0xf]
  %v64 = vld [vmem:[%s0 + $0x34] sm:$0xf]
  %v65 = vld [vmem:[%s0 + $0x38] sm:$0xf]
  %v66 = vld [vmem:[%s0 + $0x3c] sm:$0xf]
  %v67 = vld [vmem:[%s1] sm:$0xf]
  %v68 = vld [vmem:[%s1 + $0x4] sm:$0xf]
  %v69 = vld [vmem:[%s1 + $0x8] sm:$0xf]
  %v70 = vld [vmem:[%s1 + $0xc] sm:$0xf]
  %v71 = vld [vmem:[%s1 + $0x10] sm:$0x3]
  %v88 = vunpack.c.l.b16 %v51
  %v89 = vunpack.c.l.b16 %v52
  %v90 = vunpack.c.l.b16 %v53
  %v91 = vunpack.c.l.b16 %v54
  %v92 = vunpack.c.l.b16 %v55
  %v93 = vunpack.c.l.b16 %v56
  %v94 = vunpack.c.l.b16 %v57
  %v95 = vunpack.c.l.b16 %v58
  %v96 = vunpack.c.l.b16 %v59
  %v97 = vunpack.c.l.b16 %v60
  %v98 = vunpack.c.l.b16 %v61
  %v99 = vunpack.c.l.b16 %v62
  %v100 = vunpack.c.l.b16 %v63
  %v101 = vunpack.c.l.b16 %v64
  %v102 = vunpack.c.l.b16 %v65
  %v103 = vunpack.c.l.b16 %v66
  %v104 = vpack.c.b16 %v89, %v88
  %v105 = vpack.c.b16 %v91, %v90
  %v106 = vpack.c.b16 %v93, %v92
  %v107 = vpack.c.b16 %v95, %v94
  %v108 = vpack.c.b16 %v97, %v96
  %v109 = vpack.c.b16 %v99, %v98
  %v110 = vpack.c.b16 %v101, %v100
  %v111 = vpack.c.b16 %v103, %v102
  %v117 = vunpack.c.l.b16 %v67
  %v118 = vunpack.c.l.b16 %v68
  %v119 = vunpack.c.l.b16 %v69
  %v120 = vunpack.c.l.b16 %v70
  %v121 = vunpack.c.l.b16 %v71
  %v122 = vpack.c.b16 %v118, %v117
  %v123 = vpack.c.b16 %v120, %v119
  %v124 = vpack.c.b16 %v121, %v121
  %vm127 = vcmask 293888
  %v129 = vsel %vm127, %v104, 0
  %v132 = vsel %vm127, %v105, 0
  %v135 = vsel %vm127, %v106, 0
  %v138 = vsel %vm127, %v107, 0
  %v141 = vsel %vm127, %v108, 0
  %v144 = vsel %vm127, %v109, 0
  %v147 = vsel %vm127, %v110, 0
  %v150 = vsel %vm127, %v111, 0
  %vm152 = vcmask 1041408
  %v154 = vsel %vm152, %v124, 0
  %156 = vmatpush.bf16.msra.mxu0 0
  %157 = vmatpush.bf16.msra.mxu0 0
  %158 = vmatpush.bf16.msra.mxu0 0
  %159 = vmatpush.bf16.msra.mxu0 0
  %160 = vmatpush.bf16.msra.mxu0 0
  %161 = vmatpush.bf16.msra.mxu0 %v154
  %162 = vmatpush.bf16.msra.mxu0 %v123
  %163 = vmatpush.bf16.msra.mxu0 %v122
  %164 = vmatmul.bf16.gmra.mxu0 %v129
  %v165 = vpop.f32.mrf.mxu0
  %v166 = vadd.f32 0.0, %v165
  %v167 = vpop.f32.mrf.mxu0
  %v168 = vadd.f32 0.0, %v167
  %169 = vmatmul.bf16.gmra.mxu0 %v132
  %v170 = vpop.f32.mrf.mxu0
  %v171 = vadd.f32 0.0, %v170
  %v172 = vpop.f32.mrf.mxu0
  %v173 = vadd.f32 0.0, %v172
  %174 = vmatmul.bf16.gmra.mxu0 %v135
  %v175 = vpop.f32.mrf.mxu0
  %v176 = vadd.f32 0.0, %v175
  %v177 = vpop.f32.mrf.mxu0
  %v178 = vadd.f32 0.0, %v177
  %179 = vmatmul.bf16.gmra.mxu0 %v138
  %v180 = vpop.f32.mrf.mxu0
  %v181 = vadd.f32 0.0, %v180
  %v182 = vpop.f32.mrf.mxu0
  %v183 = vadd.f32 0.0, %v182
  %184 = vmatmul.bf16.gmra.mxu0 %v141
  %v185 = vpop.f32.mrf.mxu0
  %v186 = vadd.f32 0.0, %v185
  %v187 = vpop.f32.mrf.mxu0
  %v188 = vadd.f32 0.0, %v187
  %189 = vmatmul.bf16.gmra.mxu0 %v144
  %v190 = vpop.f32.mrf.mxu0
  %v191 = vadd.f32 0.0, %v190
  %v192 = vpop.f32.mrf.mxu0
  %v193 = vadd.f32 0.0, %v192
  %194 = vmatmul.bf16.gmra.mxu0 %v147
  %v195 = vpop.f32.mrf.mxu0
  %v196 = vadd.f32 0.0, %v195
  %v197 = vpop.f32.mrf.mxu0
  %v198 = vadd.f32 0.0, %v197
  %199 = vmatmul.bf16.gmra.mxu0 %v150
  %v200 = vpop.f32.mrf.mxu0
  %v201 = vadd.f32 0.0, %v200
  %v202 = vpop.f32.mrf.mxu0
  %v203 = vadd.f32 0.0, %v202
  %204 = vdwg.mxu0
  %v205 = vadd.f32 %v35, %v166
  %v206 = vadd.f32 %v36, %v168
  %v207 = vadd.f32 %v37, %v171
  %v208 = vadd.f32 %v38, %v173
  %v209 = vadd.f32 %v39, %v176
  %v210 = vadd.f32 %v40, %v178
  %v211 = vadd.f32 %v41, %v181
  %v212 = vadd.f32 %v42, %v183
  %v213 = vadd.f32 %v43, %v186
  %v214 = vadd.f32 %v44, %v188
  %v215 = vadd.f32 %v45, %v191
  %v216 = vadd.f32 %v46, %v193
  %v217 = vadd.f32 %v47, %v196
  %v218 = vadd.f32 %v48, %v198
  %v219 = vadd.f32 %v49, %v201
  %v220 = vadd.f32 %v50, %v203
  %221 = vst [vmem:[#allocation2] sm:$0xff] %v205
  %222 = vst [vmem:[#allocation2 + $0x8] sm:$0xff] %v206
  %223 = vst [vmem:[#allocation2 + $0x10] sm:$0xff] %v207
  %224 = vst [vmem:[#allocation2 + $0x18] sm:$0xff] %v208
  %225 = vst [vmem:[#allocation2 + $0x20] sm:$0xff] %v209
  %226 = vst [vmem:[#allocation2 + $0x28] sm:$0xff] %v210
  %227 = vst [vmem:[#allocation2 + $0x30] sm:$0xff] %v211
  %228 = vst [vmem:[#allocation2 + $0x38] sm:$0xff] %v212
  %229 = vst [vmem:[#allocation2 + $0x40] sm:$0xff] %v213
  %230 = vst [vmem:[#allocation2 + $0x48] sm:$0xff] %v214
  %231 = vst [vmem:[#allocation2 + $0x50] sm:$0xff] %v215
  %232 = vst [vmem:[#allocation2 + $0x58] sm:$0xff] %v216
  %233 = vst [vmem:[#allocation2 + $0x60] sm:$0xff] %v217
  %234 = vst [vmem:[#allocation2 + $0x68] sm:$0xff] %v218
  %235 = vst [vmem:[#allocation2 + $0x70] sm:$0xff] %v219
  %236 = vst [vmem:[#allocation2 + $0x78] sm:$0xff] %v220
  // Predicated region
  $region18: #{basic_conv2d_block.1} parent=0 // pred_check
    %p237 = pneg %p15
  $region19: #{basic_conv2d_block.1} parent=0 // pred_check_branch
    %239 = sbr.rel (%p237) target = $region21
  $region20: #{basic_conv2d_block.1} parent=0 // pred_region
    %v240 = vld [vmem:[#allocation2] sm:$0xff]
    %v241 = vld [vmem:[#allocation2 + $0x8] sm:$0xff]
    %v242 = vld [vmem:[#allocation2 + $0x10] sm:$0xff]
    %v243 = vld [vmem:[#allocation2 + $0x18] sm:$0xff]
    %v244 = vld [vmem:[#allocation2 + $0x20] sm:$0xff]
    %v245 = vld [vmem:[#allocation2 + $0x28] sm:$0xff]
    %v246 = vld [vmem:[#allocation2 + $0x30] sm:$0xff]
    %v247 = vld [vmem:[#allocation2 + $0x38] sm:$0xff]
    %v248 = vld [vmem:[#allocation2 + $0x40] sm:$0xff]
    %v249 = vld [vmem:[#allocation2 + $0x48] sm:$0xff]
    %v250 = vld [vmem:[#allocation2 + $0x50] sm:$0xff]
    %v251 = vld [vmem:[#allocation2 + $0x58] sm:$0xff]
    %v252 = vld [vmem:[#allocation2 + $0x60] sm:$0xff]
    %v253 = vld [vmem:[#allocation2 + $0x68] sm:$0xff]
    %v254 = vld [vmem:[#allocation2 + $0x70] sm:$0xff]
    %v255 = vld [vmem:[#allocation2 + $0x78] sm:$0xff]
    %v256 = vld [vmem:[%s2] sm:$0x1]
    %v258 = vperm.slane %v256, 0
    %v260 = vadd.f32 %v240, %v258
    %v261 = vadd.f32 %v241, %v258
    %v262 = vadd.f32 %v242, %v258
    %v263 = vadd.f32 %v243, %v258
    %v264 = vadd.f32 %v244, %v258
    %v265 = vadd.f32 %v245, %v258
    %v266 = vadd.f32 %v246, %v258
    %v267 = vadd.f32 %v247, %v258
    %v268 = vadd.f32 %v248, %v258
    %v269 = vadd.f32 %v249, %v258
    %v270 = vadd.f32 %v250, %v258
    %v271 = vadd.f32 %v251, %v258
    %v272 = vadd.f32 %v252, %v258
    %v273 = vadd.f32 %v253, %v258
    %v274 = vadd.f32 %v254, %v258
    %v275 = vadd.f32 %v255, %v258
    %v276 = vmax.f32 %v260, 0.0
    %v277 = vmax.f32 %v261, 0.0
    %v278 = vmax.f32 %v262, 0.0
    %v279 = vmax.f32 %v263, 0.0
    %v280 = vmax.f32 %v264, 0.0
    %v281 = vmax.f32 %v265, 0.0
    %v282 = vmax.f32 %v266, 0.0
    %v283 = vmax.f32 %v267, 0.0
    %v284 = vmax.f32 %v268, 0.0
    %v285 = vmax.f32 %v269, 0.0
    %v286 = vmax.f32 %v270, 0.0
    %v287 = vmax.f32 %v271, 0.0
    %v288 = vmax.f32 %v272, 0.0
    %v289 = vmax.f32 %v273, 0.0
    %v290 = vmax.f32 %v274, 0.0
    %v291 = vmax.f32 %v275, 0.0
    %292 = vst [vmem:[%s3] sm:$0xff] %v276
    %293 = vst [vmem:[%s3 + $0x8] sm:$0xff] %v277
    %294 = vst [vmem:[%s3 + $0x10] sm:$0xff] %v278
    %295 = vst [vmem:[%s3 + $0x18] sm:$0xff] %v279
    %296 = vst [vmem:[%s3 + $0x20] sm:$0xff] %v280
    %297 = vst [vmem:[%s3 + $0x28] sm:$0xff] %v281
    %298 = vst [vmem:[%s3 + $0x30] sm:$0xff] %v282
    %299 = vst [vmem:[%s3 + $0x38] sm:$0xff] %v283
    %300 = vst [vmem:[%s3 + $0x40] sm:$0xff] %v284
    %301 = vst [vmem:[%s3 + $0x48] sm:$0xff] %v285
    %302 = vst [vmem:[%s3 + $0x50] sm:$0xff] %v286
    %303 = vst [vmem:[%s3 + $0x58] sm:$0xff] %v287
    %304 = vst [vmem:[%s3 + $0x60] sm:$0xff] %v288
    %305 = vst [vmem:[%s3 + $0x68] sm:$0xff] %v289
    %306 = vst [vmem:[%s3 + $0x70] sm:$0xff] %v290
    %307 = vst [vmem:[%s3 + $0x78] sm:$0xff] %v291
  $region21: #{basic_conv2d_block.1} parent=0 // pred_fallthru
    _
  // Predicated region
  $region22: #{basic_conv2d_block.1} parent=0 // pred_check
    _
  $region23: #{basic_conv2d_block.1} parent=0 // pred_check_branch
    %309 = sbr.rel (0) target = $region25
  $region24: #{basic_conv2d_block.1} parent=0 // pred_region
    _
  $region25: #{basic_conv2d_block.1} parent=0 // pred_fallthru
    _
  // Predicated region
  $region26: #{basic_conv2d_block.1} parent=0 // pred_check
    _
  $region27: #{basic_conv2d_block.1} parent=0 // pred_check_branch
    %311 = sbr.rel (0) target = $region29
  $region28: #{basic_conv2d_block.1} parent=0 // pred_region
    _
  $region29: #{basic_conv2d_block.1} parent=0 // pred_fallthru
    _

</llo_original>
